<compile_context>
chip_gen: v7x
topology: tpu7x:2x2x1
jax: 0.10.0
libtpu: 0.0.40
codegen_flags: <defaults>
</compile_context>

<pallas_src>
import jax
import jax.numpy as jnp
from jax.experimental import pallas as pl
from jax.experimental.pallas import tpu as pltpu


def _round_up(x, m):
    return ((x + m - 1) // m) * m


def _pick_tile(n, pref, gran):
    """Largest divisor of n that is <= pref and a multiple of gran; else n (full axis)."""
    best = None
    t = gran
    while t <= min(pref, n):
        if n % t == 0:
            best = t
        t += gran
    return best if best is not None else n


# -----------------------------------------------------------------------------
# Kernel 1: per-node projections for layer 1 (x_j term; x_i + vp + b1 term).
# -----------------------------------------------------------------------------
def _node_proj_kernel(x_ref, vp_ref, w1a_ref, w1b_ref, w1c_ref, b1_ref,
                      pj_ref, pi_ref):
    x = x_ref[0]        # (N, D)
    vp = vp_ref[0]      # (1, D)
    pj_ref[0] = jnp.dot(x, w1a_ref[...], preferred_element_type=jnp.float32)
    pi_ref[0] = (jnp.dot(x, w1b_ref[...], preferred_element_type=jnp.float32)
                 + jnp.dot(vp, w1c_ref[...], preferred_element_type=jnp.float32)
                 + b1_ref[...])


# -----------------------------------------------------------------------------
# Kernel 2: edge-tile network (layers 1..5) over a (TI, TJ) tile of the edge plane,
# with the H hidden channels kept as separate lane/sublane-dense planes.
# -----------------------------------------------------------------------------
def _make_edge_kernel(H, TI, TJ, RC):
    n_chunks = TI // RC

    def kernel(pi_ref, pjt_ref, a_ref,
               w1d_ref, w2_ref, b2_ref, w3_ref, b3_ref, w4_ref, b4_ref,
               w5_ref, b5_ref, o_ref):
        # Hoist all scalar weight reads (SMEM) out of the row-chunk loop.
        w1d = [w1d_ref[c] for c in range(H)]
        hidden_layers = []
        for w_ref, b_ref in ((w2_ref, b2_ref), (w3_ref, b3_ref), (w4_ref, b4_ref)):
            ws = [[w_ref[ci, co] for co in range(H)] for ci in range(H)]
            bs = [b_ref[co] for co in range(H)]
            hidden_layers.append((ws, bs))
        w5 = [w5_ref[c] for c in range(H)]
        b5 = b5_ref[0]

        pjt = pjt_ref[0]                                   # (Hs, TJ) f32, channel-major
        pj_rows = [pjt[c:c + 1, :] for c in range(H)]      # each (1, TJ)

        # Process the (TI, TJ) tile in row chunks of RC to bound live vregs.
        for ck in range(n_chunks):
            r0 = ck * RC
            pi = pi_ref[0, r0:r0 + RC, :]                      # (RC, Hs) f32
            a = a_ref[0, r0:r0 + RC, :].astype(jnp.float32)    # (RC, TJ)

            # layer 1: broadcast-construct edge features per hidden channel + tanh.
            h = [jnp.tanh(pi[:, c:c + 1] + pj_rows[c] + a * w1d[c]) for c in range(H)]

            # layers 2-4: H->H 1x1 convs as scalar-weight fma chains over the planes.
            # (O(H^2) VPU work per edge -- intended for the module's small H; the
            #  idle MXU would take over for much larger hidden widths.)
            for ws, bs in hidden_layers:
                nh = []
                for co in range(H):
                    acc = h[0] * ws[0][co]
                    for ci in range(1, H):
                        acc = acc + h[ci] * ws[ci][co]
                    nh.append(jnp.tanh(acc + bs[co]))
                h = nh

            # layer 5: H->1 reduce, then a lane/sublane-dense (RC, TJ) store.
            out = h[0] * w5[0]
            for c in range(1, H):
                out = out + h[c] * w5[c]
            o_ref[0, r0:r0 + RC, :] = out + b5

    return kernel


def edge_network(x, A, vp, params, *, tile_i=64, tile_j=256):
    """x: (B,N,D) f32, A: (B,N,N) (f32 or bf16), vp: (B,D) f32 -> (B,N,N) f32."""
    B, N, D = x.shape
    H = params["w2"].shape[0]
    Hs = _round_up(H, 8)            # sublane-granular channel pad (NOT 128 lanes)
    f32 = jnp.float32

    def pad_cols(w):
        w = w.astype(f32)
        return jnp.pad(w, ((0, 0), (0, Hs - w.shape[1])))

    # Split the layer-1 weight over the (x_j, x_i, vp, A) channel groups.
    w1 = params["w1"].astype(f32)                    # (3D+1, H)
    w1a = pad_cols(w1[:D])                           # x_j term       (D, Hs)
    w1b = pad_cols(w1[D:2 * D])                      # x_i term       (D, Hs)
    w1c = pad_cols(w1[2 * D:3 * D])                  # vp term        (D, Hs)
    b1 = pad_cols(params["b1"].reshape(1, H))        # layer-1 bias   (1, Hs)
    w1d = w1[3 * D]                                  # A-channel weight (H,) -> SMEM

    w2 = params["w2"].astype(f32)                    # (H, H) -> SMEM scalars
    w3 = params["w3"].astype(f32)
    w4 = params["w4"].astype(f32)
    b2 = params["b2"].astype(f32)                    # (H,)
    b3 = params["b3"].astype(f32)
    b4 = params["b4"].astype(f32)
    w5 = params["w5"].reshape(H).astype(f32)         # (H,)
    b5 = params["b5"].reshape(1).astype(f32)         # (1,)

    x32 = x.astype(f32)
    vp3 = vp.reshape(B, 1, D).astype(f32)

    # ---- pass 1: per-node layer-1 projections (B, N, Hs), once per node ---------
    pj_all, pi_all = pl.pallas_call(
        _node_proj_kernel,
        out_shape=(jax.ShapeDtypeStruct((B, N, Hs), f32),
                   jax.ShapeDtypeStruct((B, N, Hs), f32)),
        grid=(B,),
        in_specs=[pl.BlockSpec((1, N, D), lambda b: (b, 0, 0)),
                  pl.BlockSpec((1, 1, D), lambda b: (b, 0, 0)),
                  pl.BlockSpec((D, Hs), lambda b: (0, 0)),
                  pl.BlockSpec((D, Hs), lambda b: (0, 0)),
                  pl.BlockSpec((D, Hs), lambda b: (0, 0)),
                  pl.BlockSpec((1, Hs), lambda b: (0, 0))],
        out_specs=(pl.BlockSpec((1, N, Hs), lambda b: (b, 0, 0)),
                   pl.BlockSpec((1, N, Hs), lambda b: (b, 0, 0))),
        compiler_params=pltpu.CompilerParams(dimension_semantics=("parallel",)),
    )(x32, vp3, w1a, w1b, w1c, b1)

    # Layout plumbing only: the edge kernel consumes pj with channels on sublanes
    # and node index on lanes so each channel row broadcasts over edge rows.
    pjt_all = jnp.transpose(pj_all, (0, 2, 1))       # (B, Hs, N)

    # ---- pass 2: tiled edge network over the (N, N) edge plane ------------------
    TI = _pick_tile(N, tile_i, 8)        # sublane-side tile (divisor of N)
    TJ = _pick_tile(N, tile_j, 128)      # lane-side tile (divisor of N)
    RC = 8 if TI % 8 == 0 else TI        # in-kernel row-chunk to bound vreg pressure
    grid = (B, N // TI, N // TJ)

    def smem_spec():
        return pl.BlockSpec(memory_space=pltpu.MemorySpace.SMEM)

    in_specs = [
        pl.BlockSpec((1, TI, Hs), lambda b, i, j: (b, i, 0)),   # pi   (row tile)
        pl.BlockSpec((1, Hs, TJ), lambda b, i, j: (b, 0, j)),   # pj^T (column tile)
        pl.BlockSpec((1, TI, TJ), lambda b, i, j: (b, i, j)),   # A    (edge tile)
        smem_spec(), smem_spec(), smem_spec(), smem_spec(), smem_spec(),
        smem_spec(), smem_spec(), smem_spec(), smem_spec(),
    ]
    out_spec = pl.BlockSpec((1, TI, TJ), lambda b, i, j: (b, i, j))

    kernel = _make_edge_kernel(H, TI, TJ, RC)
    return pl.pallas_call(
        kernel,
        out_shape=jax.ShapeDtypeStruct((B, N, N), f32),
        grid=grid,
        in_specs=in_specs,
        out_specs=out_spec,
        compiler_params=pltpu.CompilerParams(
            dimension_semantics=("parallel", "parallel", "parallel")),
    )(pi_all, pjt_all, A, w1d, w2, b2, w3, b3, w4, b4, w5, b5)


def init_params(key, input_dim, hidden_dim):
    """Deterministic synthetic weights matching the Conv2d(1x1) shapes.

    Conv2d(cin, cout, 1) weight (cout, cin, 1, 1) is stored here as W (cin, cout)."""
    c_in = 3 * input_dim + 1
    sizes = [(c_in, hidden_dim), (hidden_dim, hidden_dim), (hidden_dim, hidden_dim),
             (hidden_dim, hidden_dim), (hidden_dim, 1)]
    keys = jax.random.split(key, 2 * len(sizes))
    params = {}
    for idx, (fi, fo) in enumerate(sizes):
        bound = 1.0 / float(jnp.sqrt(jnp.float32(fi)))
        params[f"w{idx + 1}"] = jax.random.uniform(keys[2 * idx], (fi, fo), jnp.float32, -bound, bound)
        params[f"b{idx + 1}"] = jax.random.uniform(keys[2 * idx + 1], (fo,), jnp.float32, -bound, bound)
    return params


def reference(x, A, vp, params):
    """Pure-JAX transcription of the PyTorch forward (for validation)."""
    B, N, D = x.shape
    xt = jnp.transpose(x, (0, 2, 1))                                     # (B, D, N)
    m1 = jnp.broadcast_to(xt[:, :, None, :], (B, D, N, N))
    m2 = jnp.broadcast_to(xt[:, :, :, None], (B, D, N, N))
    m3 = jnp.broadcast_to(vp[:, :, None, None], (B, D, N, N))
    block = jnp.concatenate([m1, m2, m3, A[:, None]], axis=1)            # (B, 3D+1, N, N)
    feat = jnp.transpose(block, (0, 2, 3, 1))                            # (B, N, N, 3D+1)
    hp = jax.lax.Precision.HIGHEST
    h = jnp.tanh(jnp.einsum("bijc,ch->bijh", feat, params["w1"], precision=hp) + params["b1"])
    h = jnp.tanh(jnp.einsum("bijc,ch->bijh", h, params["w2"], precision=hp) + params["b2"])
    h = jnp.tanh(jnp.einsum("bijc,ch->bijh", h, params["w3"], precision=hp) + params["b3"])
    h = jnp.tanh(jnp.einsum("bijc,ch->bijh", h, params["w4"], precision=hp) + params["b4"])
    out = jnp.einsum("bijc,ch->bijh", h, params["w5"], precision=hp) + params["b5"]
    return out[..., 0]


if __name__ == "__main__":
    # Small but tiling-exercising config: grid = (2, 4, 1) with TI=64, TJ=256, RC=8.
    B, N, D, H = 2, 256, 4, 8

    key = jax.random.PRNGKey(0)
    kx, ka, kv, kp = jax.random.split(key, 4)
    x = jax.random.normal(kx, (B, N, D), jnp.float32)
    A = jax.random.uniform(ka, (B, N, N), jnp.float32)
    vp = jax.random.normal(kv, (B, D), jnp.float32)
    params = init_params(kp, D, H)

    out = edge_network(x, A, vp, params)
    out = jax.block_until_ready(out)

    ref = reference(x, A, vp, params)
    assert out.shape == (B, N, N), out.shape
    # Layers 2-5 are now pure f32 (no bf16 MXU inputs); the only precision deltas vs
    # the HIGHEST-precision reference are the default-precision node-projection dots
    # and op-ordering, so the 3e-2 bound is very generous.
    max_err = float(jnp.max(jnp.abs(out - ref)))
    if max_err > 3e-2:
        raise AssertionError(f"Pallas kernel mismatch vs reference, max |err| = {max_err}")

    print("KERNEL_OK")
</pallas_src>

<mosaic_0001>
module attributes {stable_mosaic.version = 11 : i64} {
  func.func @_node_proj_kernel(%arg0: i32, %arg1: memref<1x256x4xf32, #tpu.memory_space<vmem>>, %arg2: memref<1x1x4xf32, #tpu.memory_space<vmem>>, %arg3: memref<4x8xf32, #tpu.memory_space<vmem>>, %arg4: memref<4x8xf32, #tpu.memory_space<vmem>>, %arg5: memref<4x8xf32, #tpu.memory_space<vmem>>, %arg6: memref<1x8xf32, #tpu.memory_space<vmem>>, %arg7: memref<1x256x8xf32, #tpu.memory_space<vmem>>, %arg8: memref<1x256x8xf32, #tpu.memory_space<vmem>>) attributes {dimension_semantics = [#tpu.dimension_semantics<parallel>], iteration_bounds = array<i64: 2>, scalar_prefetch = 0 : i64, scratch_operands = 0 : i64, tpu.core_type = #tpu.core_type<tc>, window_params = [{transform_indices = @transform_0, window_bounds = array<i64: 1, 256, 4>}, {transform_indices = @transform_1, window_bounds = array<i64: 1, 1, 4>}, {pipeline_mode = #tpu.pipeline_mode<synchronous>, transform_indices = @transform_2, window_bounds = array<i64: 4, 8>}, {pipeline_mode = #tpu.pipeline_mode<synchronous>, transform_indices = @transform_3, window_bounds = array<i64: 4, 8>}, {pipeline_mode = #tpu.pipeline_mode<synchronous>, transform_indices = @transform_4, window_bounds = array<i64: 4, 8>}, {pipeline_mode = #tpu.pipeline_mode<synchronous>, transform_indices = @transform_5, window_bounds = array<i64: 1, 8>}, {transform_indices = @transform_6, window_bounds = array<i64: 1, 256, 8>}, {transform_indices = @transform_7, window_bounds = array<i64: 1, 256, 8>}]} {
    %c0 = arith.constant 0 : index
    %c0_0 = arith.constant 0 : index
    %c0_1 = arith.constant 0 : index
    %0 = vector.load %arg1[%c0, %c0_0, %c0_1] : memref<1x256x4xf32, #tpu.memory_space<vmem>>, vector<1x256x4xf32>
    %1 = vector.shape_cast %0 : vector<1x256x4xf32> to vector<256x4xf32>
    %c0_2 = arith.constant 0 : index
    %c0_3 = arith.constant 0 : index
    %c0_4 = arith.constant 0 : index
    %2 = vector.load %arg2[%c0_2, %c0_3, %c0_4] : memref<1x1x4xf32, #tpu.memory_space<vmem>>, vector<1x1x4xf32>
    %3 = vector.shape_cast %2 : vector<1x1x4xf32> to vector<1x4xf32>
    %c0_5 = arith.constant 0 : index
    %c0_6 = arith.constant 0 : index
    %4 = vector.load %arg3[%c0_5, %c0_6] : memref<4x8xf32, #tpu.memory_space<vmem>>, vector<4x8xf32>
    %cst = arith.constant dense<0.000000e+00> : vector<256x8xf32>
    %5 = tpu.matmul %1, %4, %cst {dimension_numbers = #tpu.dot_dimension_numbers<[1], [0], [0], [1], [0, 0, 1, 1], [], []>} : vector<256x4xf32>, vector<4x8xf32>, vector<256x8xf32> -> vector<256x8xf32>
    %c0_7 = arith.constant 0 : index
    %c0_8 = arith.constant 0 : index
    %c0_9 = arith.constant 0 : index
    %6 = vector.load %arg7[%c0_7, %c0_8, %c0_9] : memref<1x256x8xf32, #tpu.memory_space<vmem>>, vector<1x256x8xf32>
    %7 = vector.shape_cast %6 : vector<1x256x8xf32> to vector<256x8xf32>
    %8 = vector.shape_cast %5 : vector<256x8xf32> to vector<1x256x8xf32>
    tpu.vector_store %arg7[%c0_7, %c0_8, %c0_9], %8 {strides = array<i32>} : memref<1x256x8xf32, #tpu.memory_space<vmem>>, vector<1x256x8xf32>,
    %c0_10 = arith.constant 0 : index
    %c0_11 = arith.constant 0 : index
    %9 = vector.load %arg4[%c0_10, %c0_11] : memref<4x8xf32, #tpu.memory_space<vmem>>, vector<4x8xf32>
    %cst_12 = arith.constant dense<0.000000e+00> : vector<256x8xf32>
    %10 = tpu.matmul %1, %9, %cst_12 {dimension_numbers = #tpu.dot_dimension_numbers<[1], [0], [0], [1], [0, 0, 1, 1], [], []>} : vector<256x4xf32>, vector<4x8xf32>, vector<256x8xf32> -> vector<256x8xf32>
    %c0_13 = arith.constant 0 : index
    %c0_14 = arith.constant 0 : index
    %11 = vector.load %arg5[%c0_13, %c0_14] : memref<4x8xf32, #tpu.memory_space<vmem>>, vector<4x8xf32>
    %cst_15 = arith.constant dense<0.000000e+00> : vector<1x8xf32>
    %12 = tpu.matmul %3, %11, %cst_15 {dimension_numbers = #tpu.dot_dimension_numbers<[1], [0], [0], [1], [0, 0, 1, 1], [], []>} : vector<1x4xf32>, vector<4x8xf32>, vector<1x8xf32> -> vector<1x8xf32>
    %13 = vector.broadcast %12 : vector<1x8xf32> to vector<256x8xf32>
    %14 = arith.addf %10, %13 : vector<256x8xf32>
    %c0_16 = arith.constant 0 : index
    %c0_17 = arith.constant 0 : index
    %15 = vector.load %arg6[%c0_16, %c0_17] : memref<1x8xf32, #tpu.memory_space<vmem>>, vector<1x8xf32>
    %16 = vector.broadcast %15 : vector<1x8xf32> to vector<256x8xf32>
    %17 = arith.addf %14, %16 : vector<256x8xf32>
    %c0_18 = arith.constant 0 : index
    %c0_19 = arith.constant 0 : index
    %c0_20 = arith.constant 0 : index
    %18 = vector.load %arg8[%c0_18, %c0_19, %c0_20] : memref<1x256x8xf32, #tpu.memory_space<vmem>>, vector<1x256x8xf32>
    %19 = vector.shape_cast %18 : vector<1x256x8xf32> to vector<256x8xf32>
    %20 = vector.shape_cast %17 : vector<256x8xf32> to vector<1x256x8xf32>
    tpu.vector_store %arg8[%c0_18, %c0_19, %c0_20], %20 {strides = array<i32>} : memref<1x256x8xf32, #tpu.memory_space<vmem>>, vector<1x256x8xf32>,
    return
  }
  func.func @transform_0(%arg0: i32) -> (i32, i32, i32) {
    %c0_i32 = arith.constant 0 : i32
    %c0_i32_0 = arith.constant 0 : i32
    %c0_i32_1 = arith.constant 0 : i32
    return %arg0, %c0_i32, %c0_i32_0 : i32, i32, i32
  }
  func.func @transform_1(%arg0: i32) -> (i32, i32, i32) {
    %c0_i32 = arith.constant 0 : i32
    %c0_i32_0 = arith.constant 0 : i32
    %c0_i32_1 = arith.constant 0 : i32
    return %arg0, %c0_i32, %c0_i32_0 : i32, i32, i32
  }
  func.func @transform_2(%arg0: i32) -> (i32, i32) {
    %c0_i32 = arith.constant 0 : i32
    %c0_i32_0 = arith.constant 0 : i32
    %c0_i32_1 = arith.constant 0 : i32
    return %c0_i32, %c0_i32_0 : i32, i32
  }
  func.func @transform_3(%arg0: i32) -> (i32, i32) {
    %c0_i32 = arith.constant 0 : i32
    %c0_i32_0 = arith.constant 0 : i32
    %c0_i32_1 = arith.constant 0 : i32
    return %c0_i32, %c0_i32_0 : i32, i32
  }
  func.func @transform_4(%arg0: i32) -> (i32, i32) {
    %c0_i32 = arith.constant 0 : i32
    %c0_i32_0 = arith.constant 0 : i32
    %c0_i32_1 = arith.constant 0 : i32
    return %c0_i32, %c0_i32_0 : i32, i32
  }
  func.func @transform_5(%arg0: i32) -> (i32, i32) {
    %c0_i32 = arith.constant 0 : i32
    %c0_i32_0 = arith.constant 0 : i32
    %c0_i32_1 = arith.constant 0 : i32
    return %c0_i32, %c0_i32_0 : i32, i32
  }
  func.func @transform_6(%arg0: i32) -> (i32, i32, i32) {
    %c0_i32 = arith.constant 0 : i32
    %c0_i32_0 = arith.constant 0 : i32
    %c0_i32_1 = arith.constant 0 : i32
    return %arg0, %c0_i32, %c0_i32_0 : i32, i32, i32
  }
  func.func @transform_7(%arg0: i32) -> (i32, i32, i32) {
    %c0_i32 = arith.constant 0 : i32
    %c0_i32_0 = arith.constant 0 : i32
    %c0_i32_1 = arith.constant 0 : i32
    return %arg0, %c0_i32, %c0_i32_0 : i32, i32, i32
  }
}

</mosaic_0001>

<llo_original>
// kernel: tpu_custom_call.1
$region0: #{tpu_custom_call.1}
  #allocation0 [shape = 'u32[]', space=smem, size = 0x4, offset = 0x4, fixed_abs, tag = 'smem constant byte address 0x4 - core index']
  #allocation1 [shape = 'u32[144,128]{1,0:T(1,128)}', space=vmem, size = 0x12000, scoped, tag = 'internal scratch']
  %s0 = inlined_call_operand.vmem [shape: f32[2,256,4], index: 0, kind: input, shape index: {}]
  %s1 = inlined_call_operand.vmem [shape: f32[2,1,4], index: 1, kind: input, shape index: {}]
  %s2 = inlined_call_operand.vmem [shape: f32[4,8], index: 2, kind: input, shape index: {}]
  %s3 = inlined_call_operand.vmem [shape: f32[4,8], index: 3, kind: input, shape index: {}]
  %s4 = inlined_call_operand.vmem [shape: f32[4,8], index: 4, kind: input, shape index: {}]
  %s5 = inlined_call_operand.vmem [shape: f32[1,8], index: 5, kind: input, shape index: {}]
  %s6 = inlined_call_operand.vmem [shape: f32[2,256,8], index: 6, kind: output, shape index: {0}]
  %s7 = inlined_call_operand.vmem [shape: f32[2,256,8], index: 7, kind: output, shape index: {1}]
  %8 = xla_tuple %s6, %s7
  %s9 = sld [smem:[#allocation0]]
  $region65: #{tpu_custom_call.1} parent=0
    _
  %s11 = ssub.s32 1, %s9
  %s12 = scalar_select 0, %s11, %s9
  loop: start=0, step=1, limit=4
  $region2: #{tpu_custom_call.1} parent=0 // loop_pre_header
    _
  $region3: #{tpu_custom_call.1} parent=0 // loop_header
    %s14 = sphi 0, %s18
    %p15 = scmp.ge.s32.totalorder %s14, 4
    %s24 = sphi 0, %s26
    %s27 = sphi 0, %s24
    %s28 = sphi 0, %s27
    %s44 = sphi 0, %s28
    %s50 = sphi 0, %s52
    %s53 = sphi 0, %s50
    %s54 = sphi 0, %s53
    %s70 = sphi 0, %s54
    %s74 = sphi 0, %s74
    %s76 = sphi 0, %s74
    %s77 = sphi 0, %s76
    %s91 = sphi 0, %s77
    %s95 = sphi 0, %s95
    %s97 = sphi 0, %s95
    %s98 = sphi 0, %s97
    %s112 = sphi 0, %s98
    %s116 = sphi 0, %s116
    %s118 = sphi 0, %s116
    %s119 = sphi 0, %s118
    %s133 = sphi 0, %s119
    %s137 = sphi 0, %s137
    %s139 = sphi 0, %s137
    %s140 = sphi 0, %s139
    %s154 = sphi 0, %s140
    %s160 = sphi 0, %s162
    %s163 = sphi 0, %s160
    %s164 = sphi 0, %s163
    %s180 = sphi 0, %s164
    %s186 = sphi 0, %s188
    %s189 = sphi 0, %s186
    %s190 = sphi 0, %s189
    %s206 = sphi 0, %s190
  $region4: #{tpu_custom_call.1} parent=0 // loop_header_branch
    %17 = sbr.rel (%p15) target = $region8
  $region5: #{tpu_custom_call.1} parent=0 // loop_body
    %s19 = ssub.s32 %s14, 1
    %s20 = ssub.s32 %s14, 2
    %s21 = sadd.s32 %s14, 1
    %s22 = ssub.s32 %s14, %s21
    %p23 = scmp.eq.s32.totalorder %s22, 0
    %s25 = sadd.s32 %s24, 1
    %s26 = scalar_select %p23, %s24, %s25
    %p29 = pneg %p23
    %p30 = scmp.eq.s32.totalorder %s14, 1
    %p31 = por %p29, %p30
    %p32 = scmp.ne.s32.totalorder %s24, %s27
    %p33 = scmp.eq.s32.totalorder %s14, 0
    %p34 = por %p32, %p33
    %p35 = scmp.ne.s32.totalorder %s24, %s27
    %p36 = scmp.eq.s32.totalorder %s19, 1
    %p37 = por %p35, %p36
    %p38 = scmp.ne.s32.totalorder %s27, %s28
    %p39 = scmp.eq.s32.totalorder %s19, 0
    %p40 = por %p38, %p39
    %p41 = scmp.ne.s32.totalorder %s27, %s28
    %p42 = scmp.eq.s32.totalorder %s20, 1
    %p43 = por %p41, %p42
    %p45 = scmp.ne.s32.totalorder %s28, %s44
    %p46 = scmp.eq.s32.totalorder %s20, 0
    %p47 = por %p45, %p46
    %s48 = ssub.s32 %s14, %s21
    %p49 = scmp.eq.s32.totalorder %s48, 0
    %s51 = sadd.s32 %s50, 1
    %s52 = scalar_select %p49, %s50, %s51
    %p55 = pneg %p49
    %p56 = scmp.eq.s32.totalorder %s14, 1
    %p57 = por %p55, %p56
    %p58 = scmp.ne.s32.totalorder %s50, %s53
    %p59 = scmp.eq.s32.totalorder %s14, 0
    %p60 = por %p58, %p59
    %p61 = scmp.ne.s32.totalorder %s50, %s53
    %p62 = scmp.eq.s32.totalorder %s19, 1
    %p63 = por %p61, %p62
    %p64 = scmp.ne.s32.totalorder %s53, %s54
    %p65 = scmp.eq.s32.totalorder %s19, 0
    %p66 = por %p64, %p65
    %p67 = scmp.ne.s32.totalorder %s53, %s54
    %p68 = scmp.eq.s32.totalorder %s20, 1
    %p69 = por %p67, %p68
    %p71 = scmp.ne.s32.totalorder %s54, %s70
    %p72 = scmp.eq.s32.totalorder %s20, 0
    %p73 = por %p71, %p72
    %s75 = sadd.s32 %s74, 1
    %p78 = scmp.eq.s32.totalorder %s14, 1
    %p79 = scmp.ne.s32.totalorder %s74, %s76
    %p80 = scmp.eq.s32.totalorder %s14, 0
    %p81 = por %p79, %p80
    %p82 = scmp.ne.s32.totalorder %s74, %s76
    %p83 = scmp.eq.s32.totalorder %s19, 1
    %p84 = por %p82, %p83
    %p85 = scmp.ne.s32.totalorder %s76, %s77
    %p86 = scmp.eq.s32.totalorder %s19, 0
    %p87 = por %p85, %p86
    %p88 = scmp.ne.s32.totalorder %s76, %s77
    %p89 = scmp.eq.s32.totalorder %s20, 1
    %p90 = por %p88, %p89
    %p92 = scmp.ne.s32.totalorder %s77, %s91
    %p93 = scmp.eq.s32.totalorder %s20, 0
    %p94 = por %p92, %p93
    %s96 = sadd.s32 %s95, 1
    %p99 = scmp.eq.s32.totalorder %s14, 1
    %p100 = scmp.ne.s32.totalorder %s95, %s97
    %p101 = scmp.eq.s32.totalorder %s14, 0
    %p102 = por %p100, %p101
    %p103 = scmp.ne.s32.totalorder %s95, %s97
    %p104 = scmp.eq.s32.totalorder %s19, 1
    %p105 = por %p103, %p104
    %p106 = scmp.ne.s32.totalorder %s97, %s98
    %p107 = scmp.eq.s32.totalorder %s19, 0
    %p108 = por %p106, %p107
    %p109 = scmp.ne.s32.totalorder %s97, %s98
    %p110 = scmp.eq.s32.totalorder %s20, 1
    %p111 = por %p109, %p110
    %p113 = scmp.ne.s32.totalorder %s98, %s112
    %p114 = scmp.eq.s32.totalorder %s20, 0
    %p115 = por %p113, %p114
    %s117 = sadd.s32 %s116, 1
    %p120 = scmp.eq.s32.totalorder %s14, 1
    %p121 = scmp.ne.s32.totalorder %s116, %s118
    %p122 = scmp.eq.s32.totalorder %s14, 0
    %p123 = por %p121, %p122
    %p124 = scmp.ne.s32.totalorder %s116, %s118
    %p125 = scmp.eq.s32.totalorder %s19, 1
    %p126 = por %p124, %p125
    %p127 = scmp.ne.s32.totalorder %s118, %s119
    %p128 = scmp.eq.s32.totalorder %s19, 0
    %p129 = por %p127, %p128
    %p130 = scmp.ne.s32.totalorder %s118, %s119
    %p131 = scmp.eq.s32.totalorder %s20, 1
    %p132 = por %p130, %p131
    %p134 = scmp.ne.s32.totalorder %s119, %s133
    %p135 = scmp.eq.s32.totalorder %s20, 0
    %p136 = por %p134, %p135
    %s138 = sadd.s32 %s137, 1
    %p141 = scmp.eq.s32.totalorder %s14, 1
    %p142 = scmp.ne.s32.totalorder %s137, %s139
    %p143 = scmp.eq.s32.totalorder %s14, 0
    %p144 = por %p142, %p143
    %p145 = scmp.ne.s32.totalorder %s137, %s139
    %p146 = scmp.eq.s32.totalorder %s19, 1
    %p147 = por %p145, %p146
    %p148 = scmp.ne.s32.totalorder %s139, %s140
    %p149 = scmp.eq.s32.totalorder %s19, 0
    %p150 = por %p148, %p149
    %p151 = scmp.ne.s32.totalorder %s139, %s140
    %p152 = scmp.eq.s32.totalorder %s20, 1
    %p153 = por %p151, %p152
    %p155 = scmp.ne.s32.totalorder %s140, %s154
    %p156 = scmp.eq.s32.totalorder %s20, 0
    %p157 = por %p155, %p156
    %s158 = ssub.s32 %s14, %s21
    %p159 = scmp.eq.s32.totalorder %s158, 0
    %s161 = sadd.s32 %s160, 1
    %s162 = scalar_select %p159, %s160, %s161
    %p165 = pneg %p159
    %p166 = scmp.eq.s32.totalorder %s14, 1
    %p167 = por %p165, %p166
    %p168 = scmp.ne.s32.totalorder %s160, %s163
    %p169 = scmp.eq.s32.totalorder %s14, 0
    %p170 = por %p168, %p169
    %p171 = scmp.ne.s32.totalorder %s160, %s163
    %p172 = scmp.eq.s32.totalorder %s19, 1
    %p173 = por %p171, %p172
    %p174 = scmp.ne.s32.totalorder %s163, %s164
    %p175 = scmp.eq.s32.totalorder %s19, 0
    %p176 = por %p174, %p175
    %p177 = scmp.ne.s32.totalorder %s163, %s164
    %p178 = scmp.eq.s32.totalorder %s20, 1
    %p179 = por %p177, %p178
    %p181 = scmp.ne.s32.totalorder %s164, %s180
    %p182 = scmp.eq.s32.totalorder %s20, 0
    %p183 = por %p181, %p182
    %s184 = ssub.s32 %s14, %s21
    %p185 = scmp.eq.s32.totalorder %s184, 0
    %s187 = sadd.s32 %s186, 1
    %s188 = scalar_select %p185, %s186, %s187
    %p191 = pneg %p185
    %p192 = scmp.eq.s32.totalorder %s14, 1
    %p193 = por %p191, %p192
    %p194 = scmp.ne.s32.totalorder %s186, %s189
    %p195 = scmp.eq.s32.totalorder %s14, 0
    %p196 = por %p194, %p195
    %p197 = scmp.ne.s32.totalorder %s186, %s189
    %p198 = scmp.eq.s32.totalorder %s19, 1
    %p199 = por %p197, %p198
    %p200 = scmp.ne.s32.totalorder %s189, %s190
    %p201 = scmp.eq.s32.totalorder %s19, 0
    %p202 = por %p200, %p201
    %p203 = scmp.ne.s32.totalorder %s189, %s190
    %p204 = scmp.eq.s32.totalorder %s20, 1
    %p205 = por %p203, %p204
    %p207 = scmp.ne.s32.totalorder %s190, %s206
    %p208 = scmp.eq.s32.totalorder %s20, 0
    %p209 = por %p207, %p208
    %p210 = scmp.le.s32.totalorder 1, %s14
    %p211 = scmp.lt.s32.totalorder %s14, 3
    %p212 = pnand %p210, %p211
    %p213 = pneg %p212
    // Predicated region
    $region9: #{tpu_custom_call.1} parent=5 // pred_check
      _
    $region10: #{tpu_custom_call.1} parent=5 // pred_check_branch
      %215 = sbr.rel (%p212) target = $region12
    $region11: #{tpu_custom_call.1} parent=5 // pred_region
      %s216 = ssub.s32 %s14, 1
      // Predicated region
      $region13: #{tpu_custom_call.1} parent=11 // pred_check
        %p217 = pneg %p87
      $region14: #{tpu_custom_call.1} parent=11 // pred_check_branch
        %219 = sbr.rel (%p217) target = $region16
      $region15: #{tpu_custom_call.1} parent=11 // pred_region
        _
      $region16: #{tpu_custom_call.1} parent=11 // pred_fallthru
        _
      // Predicated region
      $region17: #{tpu_custom_call.1} parent=11 // pred_check
        %p220 = pneg %p108
      $region18: #{tpu_custom_call.1} parent=11 // pred_check_branch
        %222 = sbr.rel (%p220) target = $region20
      $region19: #{tpu_custom_call.1} parent=11 // pred_region
        _
      $region20: #{tpu_custom_call.1} parent=11 // pred_fallthru
        _
      // Predicated region
      $region21: #{tpu_custom_call.1} parent=11 // pred_check
        %p223 = pneg %p129
      $region22: #{tpu_custom_call.1} parent=11 // pred_check_branch
        %225 = sbr.rel (%p223) target = $region24
      $region23: #{tpu_custom_call.1} parent=11 // pred_region
        _
      $region24: #{tpu_custom_call.1} parent=11 // pred_fallthru
        _
      // Predicated region
      $region25: #{tpu_custom_call.1} parent=11 // pred_check
        %p226 = pneg %p150
      $region26: #{tpu_custom_call.1} parent=11 // pred_check_branch
        %228 = sbr.rel (%p226) target = $region28
      $region27: #{tpu_custom_call.1} parent=11 // pred_region
        _
      $region28: #{tpu_custom_call.1} parent=11 // pred_fallthru
        _
    $region12: #{tpu_custom_call.1} parent=5 // pred_fallthru
      _
    %p229 = scmp.lt.s32.totalorder %s14, 2
    // Predicated region
    $region29: #{tpu_custom_call.1} parent=5 // pred_check
      %p230 = pneg %p229
    $region30: #{tpu_custom_call.1} parent=5 // pred_check_branch
      %232 = sbr.rel (%p230) target = $region32
    $region31: #{tpu_custom_call.1} parent=5 // pred_region
      // Predicated region
      $region33: #{tpu_custom_call.1} parent=31 // pred_check
        %p233 = pneg %p34
      $region34: #{tpu_custom_call.1} parent=31 // pred_check_branch
        %235 = sbr.rel (%p233) target = $region36
      $region35: #{tpu_custom_call.1} parent=31 // pred_region
        %p236 = scmp.lt.s32.totalorder %s14, 1
        %s237 = scalar_select %p236, %s14, 1
        %s238 = smul.addr %s237, 32
        %s239 = smul.addr %s238, 8
        %s240 = scalar_lea.vmem %s0, %s239
      $region36: #{tpu_custom_call.1} parent=31 // pred_fallthru
        _
      // Predicated region
      $region37: #{tpu_custom_call.1} parent=31 // pred_check
        %p241 = pneg %p60
      $region38: #{tpu_custom_call.1} parent=31 // pred_check_branch
        %243 = sbr.rel (%p241) target = $region40
      $region39: #{tpu_custom_call.1} parent=31 // pred_region
        %p244 = scmp.lt.s32.totalorder %s14, 1
        %s245 = scalar_select %p244, %s14, 1
        %s246 = scalar_lea.vmem %s1, %s245
      $region40: #{tpu_custom_call.1} parent=31 // pred_fallthru
        _
    $region32: #{tpu_custom_call.1} parent=5 // pred_fallthru
      _
    %p247 = scmp.le.s32.totalorder 1, %s14
    %p248 = scmp.lt.s32.totalorder %s14, 3
    %p249 = pnand %p247, %p248
    %p250 = pneg %p249
    // Predicated region
    $region41: #{tpu_custom_call.1} parent=5 // pred_check
      _
    $region42: #{tpu_custom_call.1} parent=5 // pred_check_branch
      %252 = sbr.rel (%p249) target = $region44
    $region43: #{tpu_custom_call.1} parent=5 // pred_region
      %s253 = ssub.s32 %s14, 1
      %p254 = scmp.lt.s32.totalorder %s19, 1
      %s255 = scalar_select %p254, %s19, 1
      %s256 = smul.addr %s255, 32
      %s257 = smul.addr %s256, 8
      %s258 = scalar_lea.vmem %s0, %s257
      %p259 = pneg %p40
      %p260 = pneg %p37
      %p261 = scmp.lt.s32.totalorder %s19, 1
      %s262 = scalar_select %p261, %s19, 1
      %s263 = scalar_lea.vmem %s1, %s262
      %p264 = pneg %p66
      %p265 = pneg %p63
      %p266 = pneg %p87
      %p267 = pneg %p84
      %p268 = pneg %p108
      %p269 = pneg %p105
      %p270 = pneg %p129
      %p271 = pneg %p126
      %p272 = pneg %p150
      %p273 = pneg %p147
      %p274 = pneg %p176
      %p275 = pneg %p173
      %p276 = scmp.lt.s32.totalorder %s19, 1
      %s277 = scalar_select %p276, %s19, 1
      %s278 = smul.addr %s277, 32
      %s279 = smul.addr %s278, 8
      %s280 = scalar_lea.vmem %s6, %s279
      %p281 = pneg %p202
      %p282 = pneg %p199
      %p283 = scmp.lt.s32.totalorder %s19, 1
      %s284 = scalar_select %p283, %s19, 1
      %s285 = smul.addr %s284, 32
      %s286 = smul.addr %s285, 8
      %s287 = scalar_lea.vmem %s7, %s286
      %p288 = scmp.lt.s32.totalorder %s19, 1
      %s289 = scalar_select %p288, %s19, 1
      %s290 = smul.addr %s289, 32
      %s291 = smul.addr %s290, 8
      %s292 = scalar_lea.vmem %s0, %s291
      %p293 = scmp.lt.s32.totalorder %s19, 1
      %s294 = scalar_select %p293, %s19, 1
      %s295 = scalar_lea.vmem %s1, %s294
      %p296 = scmp.lt.s32.totalorder %s19, 1
      %s297 = scalar_select %p296, %s19, 1
      %s298 = smul.addr %s297, 32
      %s299 = smul.addr %s298, 8
      %s300 = scalar_lea.vmem %s6, %s299
      %p301 = scmp.lt.s32.totalorder %s19, 1
      %s302 = scalar_select %p301, %s19, 1
      %s303 = smul.addr %s302, 32
      %s304 = smul.addr %s303, 8
      %s305 = scalar_lea.vmem %s7, %s304
      %v306 = vld [vmem:[%s292] sm:$0xff]
      %v307 = vld [vmem:[%s292 + $0x8] sm:$0xff]
      %v308 = vld [vmem:[%s292 + $0x10] sm:$0xff]
      %v309 = vld [vmem:[%s292 + $0x18] sm:$0xff]
      %v310 = vld [vmem:[%s292 + $0x20] sm:$0xff]
      %v311 = vld [vmem:[%s292 + $0x28] sm:$0xff]
      %v312 = vld [vmem:[%s292 + $0x30] sm:$0xff]
      %v313 = vld [vmem:[%s292 + $0x38] sm:$0xff]
      %v314 = vld [vmem:[%s292 + $0x40] sm:$0xff]
      %v315 = vld [vmem:[%s292 + $0x48] sm:$0xff]
      %v316 = vld [vmem:[%s292 + $0x50] sm:$0xff]
      %v317 = vld [vmem:[%s292 + $0x58] sm:$0xff]
      %v318 = vld [vmem:[%s292 + $0x60] sm:$0xff]
      %v319 = vld [vmem:[%s292 + $0x68] sm:$0xff]
      %v320 = vld [vmem:[%s292 + $0x70] sm:$0xff]
      %v321 = vld [vmem:[%s292 + $0x78] sm:$0xff]
      %v322 = vld [vmem:[%s292 + $0x80] sm:$0xff]
      %v323 = vld [vmem:[%s292 + $0x88] sm:$0xff]
      %v324 = vld [vmem:[%s292 + $0x90] sm:$0xff]
      %v325 = vld [vmem:[%s292 + $0x98] sm:$0xff]
      %v326 = vld [vmem:[%s292 + $0xa0] sm:$0xff]
      %v327 = vld [vmem:[%s292 + $0xa8] sm:$0xff]
      %v328 = vld [vmem:[%s292 + $0xb0] sm:$0xff]
      %v329 = vld [vmem:[%s292 + $0xb8] sm:$0xff]
      %v330 = vld [vmem:[%s292 + $0xc0] sm:$0xff]
      %v331 = vld [vmem:[%s292 + $0xc8] sm:$0xff]
      %v332 = vld [vmem:[%s292 + $0xd0] sm:$0xff]
      %v333 = vld [vmem:[%s292 + $0xd8] sm:$0xff]
      %v334 = vld [vmem:[%s292 + $0xe0] sm:$0xff]
      %v335 = vld [vmem:[%s292 + $0xe8] sm:$0xff]
      %v336 = vld [vmem:[%s292 + $0xf0] sm:$0xff]
      %v337 = vld [vmem:[%s292 + $0xf8] sm:$0xff]
      %v338 = vld [vmem:[%s295] sm:$0x1]
      %v339 = vld [vmem:[%s2] sm:$0xf]
      %vm340 = vcmask 31744
      %v342 = vsel %vm340, %v306, 0
      %v345 = vsel %vm340, %v307, 0
      %v348 = vsel %vm340, %v308, 0
      %v351 = vsel %vm340, %v309, 0
      %v354 = vsel %vm340, %v310, 0
      %v357 = vsel %vm340, %v311, 0
      %v360 = vsel %vm340, %v312, 0
      %v363 = vsel %vm340, %v313, 0
      %v366 = vsel %vm340, %v314, 0
      %v369 = vsel %vm340, %v315, 0
      %v372 = vsel %vm340, %v316, 0
      %v375 = vsel %vm340, %v317, 0
      %v378 = vsel %vm340, %v318, 0
      %v381 = vsel %vm340, %v319, 0
      %v384 = vsel %vm340, %v320, 0
      %v387 = vsel %vm340, %v321, 0
      %v390 = vsel %vm340, %v322, 0
      %v393 = vsel %vm340, %v323, 0
      %v396 = vsel %vm340, %v324, 0
      %v399 = vsel %vm340, %v325, 0
      %v402 = vsel %vm340, %v326, 0
      %v405 = vsel %vm340, %v327, 0
      %v408 = vsel %vm340, %v328, 0
      %v411 = vsel %vm340, %v329, 0
      %v414 = vsel %vm340, %v330, 0
      %v417 = vsel %vm340, %v331, 0
      %v420 = vsel %vm340, %v332, 0
      %v423 = vsel %vm340, %v333, 0
      %v426 = vsel %vm340, %v334, 0
      %v429 = vsel %vm340, %v335, 0
      %v432 = vsel %vm340, %v336, 0
      %v435 = vsel %vm340, %v337, 0
      %vm437 = vcmask 1043456
      %v439 = vsel %vm437, %v339, 0
      %441 = vmatprep.subr.mxu0 0.0
      %442 = vmatpush1.msra.mxu0 %v439
      %443 = vmatprep.subr.mxu0 0.0
      %444 = vmatpush1.msra.mxu0 0.0
      %445 = vmatprep.subr.mxu0 0.0
      %446 = vmatpush1.msra.mxu0 0.0
      %447 = vmatprep.subr.mxu0 0.0
      %448 = vmatpush1.msra.mxu0 0.0
      %449 = vmatprep.subr.mxu0 0.0
      %450 = vmatpush1.msra.mxu0 0.0
      %451 = vmatprep.subr.mxu0 0.0
      %452 = vmatpush1.msra.mxu0 0.0
      %453 = vmatprep.subr.mxu0 0.0
      %454 = vmatpush1.msra.mxu0 0.0
      %455 = vmatprep.subr.mxu0 0.0
      %456 = vmatpush1.msra.mxu0 0.0
      %457 = vmatprep.subr.mxu0 0.0
      %458 = vmatpush1.msra.mxu0 0.0
      %459 = vmatprep.subr.mxu0 0.0
      %460 = vmatpush1.msra.mxu0 0.0
      %461 = vmatprep.subr.mxu0 0.0
      %462 = vmatpush1.msra.mxu0 0.0
      %463 = vmatprep.subr.mxu0 0.0
      %464 = vmatpush1.msra.mxu0 0.0
      %465 = vmatprep.subr.mxu0 0.0
      %466 = vmatpush1.msra.mxu0 0.0
      %467 = vmatprep.subr.mxu0 0.0
      %468 = vmatpush1.msra.mxu0 0.0
      %469 = vmatprep.subr.mxu0 0.0
      %470 = vmatpush1.msra.mxu0 0.0
      %471 = vmatprep.subr.mxu0 0.0
      %472 = vmatpush1.msra.mxu0 0.0
      %473 = vmatprep.subr.mxu0 0.0
      %474 = vmatpush1.msra.mxu0 0.0
      %475 = vmatprep.subr.mxu0 0.0
      %476 = vmatpush1.msra.mxu0 0.0
      %477 = vmatprep.subr.mxu0 0.0
      %478 = vmatpush1.msra.mxu0 0.0
      %479 = vmatprep.subr.mxu0 0.0
      %480 = vmatpush1.msra.mxu0 0.0
      %481 = vmatprep.subr.mxu0 0.0
      %482 = vmatpush1.msra.mxu0 0.0
      %483 = vmatprep.subr.mxu0 0.0
      %484 = vmatpush1.msra.mxu0 0.0
      %485 = vmatprep.subr.mxu0 0.0
      %486 = vmatpush1.msra.mxu0 0.0
      %487 = vmatprep.subr.mxu0 0.0
      %488 = vmatpush1.msra.mxu0 0.0
      %489 = vmatprep.subr.mxu0 0.0
      %490 = vmatpush1.msra.mxu0 0.0
      %491 = vmatprep.subr.mxu0 0.0
      %492 = vmatpush1.msra.mxu0 0.0
      %493 = vmatprep.subr.mxu0 0.0
      %494 = vmatpush1.msra.mxu0 0.0
      %495 = vmatprep.subr.mxu0 0.0
      %496 = vmatpush1.msra.mxu0 0.0
      %497 = vmatprep.subr.mxu0 0.0
      %498 = vmatpush1.msra.mxu0 0.0
      %499 = vmatprep.subr.mxu0 0.0
      %500 = vmatpush1.msra.mxu0 0.0
      %501 = vmatprep.subr.mxu0 0.0
      %502 = vmatpush1.msra.mxu0 0.0
      %503 = vmatprep.subr.mxu0 0.0
      %504 = vmatpush1.msra.mxu0 0.0
      %505 = vmatprep.mubr.f32.mxu0 0.0
      %506 = vmatmul.mubr.f32.gmra.mrb[0].mxu0 %v342
      %v507 = vpop.f32.mrb[0].mxu0
      %v508 = vadd.f32 0.0, %v507
      %v509 = vpop.f32.mrb[0].mxu0
      %510 = vmatprep.mubr.f32.mxu0 0.0
      %511 = vmatmul.mubr.f32.gmra.mrb[0].mxu0 %v345
      %v512 = vpop.f32.mrb[0].mxu0
      %v513 = vadd.f32 0.0, %v512
      %v514 = vpop.f32.mrb[0].mxu0
      %515 = vmatprep.mubr.f32.mxu0 0.0
      %516 = vmatmul.mubr.f32.gmra.mrb[0].mxu0 %v348
      %v517 = vpop.f32.mrb[0].mxu0
      %v518 = vadd.f32 0.0, %v517
      %v519 = vpop.f32.mrb[0].mxu0
      %520 = vmatprep.mubr.f32.mxu0 0.0
      %521 = vmatmul.mubr.f32.gmra.mrb[0].mxu0 %v351
      %v522 = vpop.f32.mrb[0].mxu0
      %v523 = vadd.f32 0.0, %v522
      %v524 = vpop.f32.mrb[0].mxu0
      %525 = vmatprep.mubr.f32.mxu0 0.0
      %526 = vmatmul.mubr.f32.gmra.mrb[0].mxu0 %v354
      %v527 = vpop.f32.mrb[0].mxu0
      %v528 = vadd.f32 0.0, %v527
      %v529 = vpop.f32.mrb[0].mxu0
      %530 = vmatprep.mubr.f32.mxu0 0.0
      %531 = vmatmul.mubr.f32.gmra.mrb[0].mxu0 %v357
      %v532 = vpop.f32.mrb[0].mxu0
      %v533 = vadd.f32 0.0, %v532
      %v534 = vpop.f32.mrb[0].mxu0
      %535 = vmatprep.mubr.f32.mxu0 0.0
      %536 = vmatmul.mubr.f32.gmra.mrb[0].mxu0 %v360
      %v537 = vpop.f32.mrb[0].mxu0
      %v538 = vadd.f32 0.0, %v537
      %v539 = vpop.f32.mrb[0].mxu0
      %540 = vmatprep.mubr.f32.mxu0 0.0
      %541 = vmatmul.mubr.f32.gmra.mrb[0].mxu0 %v363
      %v542 = vpop.f32.mrb[0].mxu0
      %v543 = vadd.f32 0.0, %v542
      %v544 = vpop.f32.mrb[0].mxu0
      %545 = vmatprep.mubr.f32.mxu0 0.0
      %546 = vmatmul.mubr.f32.gmra.mrb[0].mxu0 %v366
      %v547 = vpop.f32.mrb[0].mxu0
      %v548 = vadd.f32 0.0, %v547
      %v549 = vpop.f32.mrb[0].mxu0
      %550 = vmatprep.mubr.f32.mxu0 0.0
      %551 = vmatmul.mubr.f32.gmra.mrb[0].mxu0 %v369
      %v552 = vpop.f32.mrb[0].mxu0
      %v553 = vadd.f32 0.0, %v552
      %v554 = vpop.f32.mrb[0].mxu0
      %555 = vmatprep.mubr.f32.mxu0 0.0
      %556 = vmatmul.mubr.f32.gmra.mrb[0].mxu0 %v372
      %v557 = vpop.f32.mrb[0].mxu0
      %v558 = vadd.f32 0.0, %v557
      %v559 = vpop.f32.mrb[0].mxu0
      %560 = vmatprep.mubr.f32.mxu0 0.0
      %561 = vmatmul.mubr.f32.gmra.mrb[0].mxu0 %v375
      %v562 = vpop.f32.mrb[0].mxu0
      %v563 = vadd.f32 0.0, %v562
      %v564 = vpop.f32.mrb[0].mxu0
      %565 = vmatprep.mubr.f32.mxu0 0.0
      %566 = vmatmul.mubr.f32.gmra.mrb[0].mxu0 %v378
      %v567 = vpop.f32.mrb[0].mxu0
      %v568 = vadd.f32 0.0, %v567
      %v569 = vpop.f32.mrb[0].mxu0
      %570 = vmatprep.mubr.f32.mxu0 0.0
      %571 = vmatmul.mubr.f32.gmra.mrb[0].mxu0 %v381
      %v572 = vpop.f32.mrb[0].mxu0
      %v573 = vadd.f32 0.0, %v572
      %v574 = vpop.f32.mrb[0].mxu0
      %575 = vmatprep.mubr.f32.mxu0 0.0
      %576 = vmatmul.mubr.f32.gmra.mrb[0].mxu0 %v384
      %v577 = vpop.f32.mrb[0].mxu0
      %v578 = vadd.f32 0.0, %v577
      %v579 = vpop.f32.mrb[0].mxu0
      %580 = vmatprep.mubr.f32.mxu0 0.0
      %581 = vmatmul.mubr.f32.gmra.mrb[0].mxu0 %v387
      %v582 = vpop.f32.mrb[0].mxu0
      %v583 = vadd.f32 0.0, %v582
      %v584 = vpop.f32.mrb[0].mxu0
      %585 = vmatprep.mubr.f32.mxu0 0.0
      %586 = vmatmul.mubr.f32.gmra.mrb[0].mxu0 %v390
      %v587 = vpop.f32.mrb[0].mxu0
      %v588 = vadd.f32 0.0, %v587
      %v589 = vpop.f32.mrb[0].mxu0
      %590 = vmatprep.mubr.f32.mxu0 0.0
      %591 = vmatmul.mubr.f32.gmra.mrb[0].mxu0 %v393
      %v592 = vpop.f32.mrb[0].mxu0
      %v593 = vadd.f32 0.0, %v592
      %v594 = vpop.f32.mrb[0].mxu0
      %595 = vmatprep.mubr.f32.mxu0 0.0
      %596 = vmatmul.mubr.f32.gmra.mrb[0].mxu0 %v396
      %v597 = vpop.f32.mrb[0].mxu0
      %v598 = vadd.f32 0.0, %v597
      %v599 = vpop.f32.mrb[0].mxu0
      %600 = vmatprep.mubr.f32.mxu0 0.0
      %601 = vmatmul.mubr.f32.gmra.mrb[0].mxu0 %v399
      %v602 = vpop.f32.mrb[0].mxu0
      %v603 = vadd.f32 0.0, %v602
      %v604 = vpop.f32.mrb[0].mxu0
      %605 = vmatprep.mubr.f32.mxu0 0.0
      %606 = vmatmul.mubr.f32.gmra.mrb[0].mxu0 %v402
      %v607 = vpop.f32.mrb[0].mxu0
      %v608 = vadd.f32 0.0, %v607
      %v609 = vpop.f32.mrb[0].mxu0
      %610 = vmatprep.mubr.f32.mxu0 0.0
      %611 = vmatmul.mubr.f32.gmra.mrb[0].mxu0 %v405
      %v612 = vpop.f32.mrb[0].mxu0
      %v613 = vadd.f32 0.0, %v612
      %v614 = vpop.f32.mrb[0].mxu0
      %615 = vmatprep.mubr.f32.mxu0 0.0
      %616 = vmatmul.mubr.f32.gmra.mrb[0].mxu0 %v408
      %v617 = vpop.f32.mrb[0].mxu0
      %v618 = vadd.f32 0.0, %v617
      %v619 = vpop.f32.mrb[0].mxu0
      %620 = vmatprep.mubr.f32.mxu0 0.0
      %621 = vmatmul.mubr.f32.gmra.mrb[0].mxu0 %v411
      %v622 = vpop.f32.mrb[0].mxu0
      %v623 = vadd.f32 0.0, %v622
      %v624 = vpop.f32.mrb[0].mxu0
      %625 = vmatprep.mubr.f32.mxu0 0.0
      %626 = vmatmul.mubr.f32.gmra.mrb[0].mxu0 %v414
      %v627 = vpop.f32.mrb[0].mxu0
      %v628 = vadd.f32 0.0, %v627
      %v629 = vpop.f32.mrb[0].mxu0
      %630 = vmatprep.mubr.f32.mxu0 0.0
      %631 = vmatmul.mubr.f32.gmra.mrb[0].mxu0 %v417
      %v632 = vpop.f32.mrb[0].mxu0
      %v633 = vadd.f32 0.0, %v632
      %v634 = vpop.f32.mrb[0].mxu0
      %635 = vmatprep.mubr.f32.mxu0 0.0
      %636 = vmatmul.mubr.f32.gmra.mrb[0].mxu0 %v420
      %v637 = vpop.f32.mrb[0].mxu0
      %v638 = vadd.f32 0.0, %v637
      %v639 = vpop.f32.mrb[0].mxu0
      %640 = vmatprep.mubr.f32.mxu0 0.0
      %641 = vmatmul.mubr.f32.gmra.mrb[0].mxu0 %v423
      %v642 = vpop.f32.mrb[0].mxu0
      %v643 = vadd.f32 0.0, %v642
      %v644 = vpop.f32.mrb[0].mxu0
      %645 = vmatprep.mubr.f32.mxu0 0.0
      %646 = vmatmul.mubr.f32.gmra.mrb[0].mxu0 %v426
      %v647 = vpop.f32.mrb[0].mxu0
      %v648 = vadd.f32 0.0, %v647
      %v649 = vpop.f32.mrb[0].mxu0
      %650 = vmatprep.mubr.f32.mxu0 0.0
      %651 = vmatmul.mubr.f32.gmra.mrb[0].mxu0 %v429
      %v652 = vpop.f32.mrb[0].mxu0
      %v653 = vadd.f32 0.0, %v652
      %v654 = vpop.f32.mrb[0].mxu0
      %655 = vmatprep.mubr.f32.mxu0 0.0
      %656 = vmatmul.mubr.f32.gmra.mrb[0].mxu0 %v432
      %v657 = vpop.f32.mrb[0].mxu0
      %v658 = vadd.f32 0.0, %v657
      %v659 = vpop.f32.mrb[0].mxu0
      %660 = vmatprep.mubr.f32.mxu0 0.0
      %661 = vmatmul.mubr.f32.gmra.mrb[0].mxu0 %v435
      %v662 = vpop.f32.mrb[0].mxu0
      %v663 = vadd.f32 0.0, %v662
      %v664 = vpop.f32.mrb[0].mxu0
      %665 = vdwg.mxu0
      %vm666 = vcmask 64512
      %667 = vst.msk [vmem:[%s300] sm:$0xff] %vm666, %v508
      %668 = vst.msk [vmem:[%s300 + $0x8] sm:$0xff] %vm666, %v513
      %669 = vst.msk [vmem:[%s300 + $0x10] sm:$0xff] %vm666, %v518
      %670 = vst.msk [vmem:[%s300 + $0x18] sm:$0xff] %vm666, %v523
      %671 = vst.msk [vmem:[%s300 + $0x20] sm:$0xff] %vm666, %v528
      %672 = vst.msk [vmem:[%s300 + $0x28] sm:$0xff] %vm666, %v533
      %673 = vst.msk [vmem:[%s300 + $0x30] sm:$0xff] %vm666, %v538
      %674 = vst.msk [vmem:[%s300 + $0x38] sm:$0xff] %vm666, %v543
      %675 = vst.msk [vmem:[%s300 + $0x40] sm:$0xff] %vm666, %v548
      %676 = vst.msk [vmem:[%s300 + $0x48] sm:$0xff] %vm666, %v553
      %677 = vst.msk [vmem:[%s300 + $0x50] sm:$0xff] %vm666, %v558
      %678 = vst.msk [vmem:[%s300 + $0x58] sm:$0xff] %vm666, %v563
      %679 = vst.msk [vmem:[%s300 + $0x60] sm:$0xff] %vm666, %v568
      %680 = vst.msk [vmem:[%s300 + $0x68] sm:$0xff] %vm666, %v573
      %681 = vst.msk [vmem:[%s300 + $0x70] sm:$0xff] %vm666, %v578
      %682 = vst.msk [vmem:[%s300 + $0x78] sm:$0xff] %vm666, %v583
      %683 = vst.msk [vmem:[%s300 + $0x80] sm:$0xff] %vm666, %v588
      %684 = vst.msk [vmem:[%s300 + $0x88] sm:$0xff] %vm666, %v593
      %685 = vst.msk [vmem:[%s300 + $0x90] sm:$0xff] %vm666, %v598
      %686 = vst.msk [vmem:[%s300 + $0x98] sm:$0xff] %vm666, %v603
      %687 = vst.msk [vmem:[%s300 + $0xa0] sm:$0xff] %vm666, %v608
      %688 = vst.msk [vmem:[%s300 + $0xa8] sm:$0xff] %vm666, %v613
      %689 = vst.msk [vmem:[%s300 + $0xb0] sm:$0xff] %vm666, %v618
      %690 = vst.msk [vmem:[%s300 + $0xb8] sm:$0xff] %vm666, %v623
      %691 = vst.msk [vmem:[%s300 + $0xc0] sm:$0xff] %vm666, %v628
      %692 = vst.msk [vmem:[%s300 + $0xc8] sm:$0xff] %vm666, %v633
      %693 = vst.msk [vmem:[%s300 + $0xd0] sm:$0xff] %vm666, %v638
      %694 = vst.msk [vmem:[%s300 + $0xd8] sm:$0xff] %vm666, %v643
      %695 = vst.msk [vmem:[%s300 + $0xe0] sm:$0xff] %vm666, %v648
      %696 = vst.msk [vmem:[%s300 + $0xe8] sm:$0xff] %vm666, %v653
      %697 = vst.msk [vmem:[%s300 + $0xf0] sm:$0xff] %vm666, %v658
      %698 = vst.msk [vmem:[%s300 + $0xf8] sm:$0xff] %vm666, %v663
      %v699 = vld [vmem:[%s3] sm:$0xf]
      %v700 = vld [vmem:[%s4] sm:$0xf]
      %v702 = vsel %vm340, %v338, 0
      %v705 = vsel %vm437, %v700, 0
      %707 = vmatprep.subr.mxu0 0.0
      %708 = vmatpush1.msra.mxu0 %v705
      %709 = vmatprep.subr.mxu0 0.0
      %710 = vmatpush1.msra.mxu0 0.0
      %711 = vmatprep.subr.mxu0 0.0
      %712 = vmatpush1.msra.mxu0 0.0
      %713 = vmatprep.subr.mxu0 0.0
      %714 = vmatpush1.msra.mxu0 0.0
      %715 = vmatprep.subr.mxu0 0.0
      %716 = vmatpush1.msra.mxu0 0.0
      %717 = vmatprep.subr.mxu0 0.0
      %718 = vmatpush1.msra.mxu0 0.0
      %719 = vmatprep.subr.mxu0 0.0
      %720 = vmatpush1.msra.mxu0 0.0
      %721 = vmatprep.subr.mxu0 0.0
      %722 = vmatpush1.msra.mxu0 0.0
      %723 = vmatprep.subr.mxu0 0.0
      %724 = vmatpush1.msra.mxu0 0.0
      %725 = vmatprep.subr.mxu0 0.0
      %726 = vmatpush1.msra.mxu0 0.0
      %727 = vmatprep.subr.mxu0 0.0
      %728 = vmatpush1.msra.mxu0 0.0
      %729 = vmatprep.subr.mxu0 0.0
      %730 = vmatpush1.msra.mxu0 0.0
      %731 = vmatprep.subr.mxu0 0.0
      %732 = vmatpush1.msra.mxu0 0.0
      %733 = vmatprep.subr.mxu0 0.0
      %734 = vmatpush1.msra.mxu0 0.0
      %735 = vmatprep.subr.mxu0 0.0
      %736 = vmatpush1.msra.mxu0 0.0
      %737 = vmatprep.subr.mxu0 0.0
      %738 = vmatpush1.msra.mxu0 0.0
      %739 = vmatprep.subr.mxu0 0.0
      %740 = vmatpush1.msra.mxu0 0.0
      %741 = vmatprep.subr.mxu0 0.0
      %742 = vmatpush1.msra.mxu0 0.0
      %743 = vmatprep.subr.mxu0 0.0
      %744 = vmatpush1.msra.mxu0 0.0
      %745 = vmatprep.subr.mxu0 0.0
      %746 = vmatpush1.msra.mxu0 0.0
      %747 = vmatprep.subr.mxu0 0.0
      %748 = vmatpush1.msra.mxu0 0.0
      %749 = vmatprep.subr.mxu0 0.0
      %750 = vmatpush1.msra.mxu0 0.0
      %751 = vmatprep.subr.mxu0 0.0
      %752 = vmatpush1.msra.mxu0 0.0
      %753 = vmatprep.subr.mxu0 0.0
      %754 = vmatpush1.msra.mxu0 0.0
      %755 = vmatprep.subr.mxu0 0.0
      %756 = vmatpush1.msra.mxu0 0.0
      %757 = vmatprep.subr.mxu0 0.0
      %758 = vmatpush1.msra.mxu0 0.0
      %759 = vmatprep.subr.mxu0 0.0
      %760 = vmatpush1.msra.mxu0 0.0
      %761 = vmatprep.subr.mxu0 0.0
      %762 = vmatpush1.msra.mxu0 0.0
      %763 = vmatprep.subr.mxu0 0.0
      %764 = vmatpush1.msra.mxu0 0.0
      %765 = vmatprep.subr.mxu0 0.0
      %766 = vmatpush1.msra.mxu0 0.0
      %767 = vmatprep.subr.mxu0 0.0
      %768 = vmatpush1.msra.mxu0 0.0
      %769 = vmatprep.subr.mxu0 0.0
      %770 = vmatpush1.msra.mxu0 0.0
      %771 = vmatprep.mubr.f32.mxu0 0.0
      %772 = vmatmul.mubr.f32.gmra.mrb[0].mxu0 %v702
      %v773 = vpop.f32.mrb[0].mxu0
      %v774 = vadd.f32 0.0, %v773
      %v775 = vpop.f32.mrb[0].mxu0
      %776 = vdwg.mxu0
      %v777 = vlaneseq
      %v778 = vshrl.u32 %v777, 7
      %v779 = vsub.s32 0, %v778
      %v780 = vrot.slane %v774, %v779
      %v782 = vsel %vm437, %v699, 0
      %784 = vmatprep.subr.mxu0 0.0
      %785 = vmatpush1.msra.mxu0 %v782
      %786 = vmatprep.subr.mxu0 0.0
      %787 = vmatpush1.msra.mxu0 0.0
      %788 = vmatprep.subr.mxu0 0.0
      %789 = vmatpush1.msra.mxu0 0.0
      %790 = vmatprep.subr.mxu0 0.0
      %791 = vmatpush1.msra.mxu0 0.0
      %792 = vmatprep.subr.mxu0 0.0
      %793 = vmatpush1.msra.mxu0 0.0
      %794 = vmatprep.subr.mxu0 0.0
      %795 = vmatpush1.msra.mxu0 0.0
      %796 = vmatprep.subr.mxu0 0.0
      %797 = vmatpush1.msra.mxu0 0.0
      %798 = vmatprep.subr.mxu0 0.0
      %799 = vmatpush1.msra.mxu0 0.0
      %800 = vmatprep.subr.mxu0 0.0
      %801 = vmatpush1.msra.mxu0 0.0
      %802 = vmatprep.subr.mxu0 0.0
      %803 = vmatpush1.msra.mxu0 0.0
      %804 = vmatprep.subr.mxu0 0.0
      %805 = vmatpush1.msra.mxu0 0.0
      %806 = vmatprep.subr.mxu0 0.0
      %807 = vmatpush1.msra.mxu0 0.0
      %808 = vmatprep.subr.mxu0 0.0
      %809 = vmatpush1.msra.mxu0 0.0
      %810 = vmatprep.subr.mxu0 0.0
      %811 = vmatpush1.msra.mxu0 0.0
      %812 = vmatprep.subr.mxu0 0.0
      %813 = vmatpush1.msra.mxu0 0.0
      %814 = vmatprep.subr.mxu0 0.0
      %815 = vmatpush1.msra.mxu0 0.0
      %816 = vmatprep.subr.mxu0 0.0
      %817 = vmatpush1.msra.mxu0 0.0
      %818 = vmatprep.subr.mxu0 0.0
      %819 = vmatpush1.msra.mxu0 0.0
      %820 = vmatprep.subr.mxu0 0.0
      %821 = vmatpush1.msra.mxu0 0.0
      %822 = vmatprep.subr.mxu0 0.0
      %823 = vmatpush1.msra.mxu0 0.0
      %824 = vmatprep.subr.mxu0 0.0
      %825 = vmatpush1.msra.mxu0 0.0
      %826 = vmatprep.subr.mxu0 0.0
      %827 = vmatpush1.msra.mxu0 0.0
      %828 = vmatprep.subr.mxu0 0.0
      %829 = vmatpush1.msra.mxu0 0.0
      %830 = vmatprep.subr.mxu0 0.0
      %831 = vmatpush1.msra.mxu0 0.0
      %832 = vmatprep.subr.mxu0 0.0
      %833 = vmatpush1.msra.mxu0 0.0
      %834 = vmatprep.subr.mxu0 0.0
      %835 = vmatpush1.msra.mxu0 0.0
      %836 = vmatprep.subr.mxu0 0.0
      %837 = vmatpush1.msra.mxu0 0.0
      %838 = vmatprep.subr.mxu0 0.0
      %839 = vmatpush1.msra.mxu0 0.0
      %840 = vmatprep.subr.mxu0 0.0
      %841 = vmatpush1.msra.mxu0 0.0
      %842 = vmatprep.subr.mxu0 0.0
      %843 = vmatpush1.msra.mxu0 0.0
      %844 = vmatprep.subr.mxu0 0.0
      %845 = vmatpush1.msra.mxu0 0.0
      %846 = vmatprep.subr.mxu0 0.0
      %847 = vmatpush1.msra.mxu0 0.0
      %848 = vmatprep.mubr.f32.mxu0 0.0
      %849 = vmatmul.mubr.f32.gmra.mrb[0].mxu0 %v342
      %v850 = vpop.f32.mrb[0].mxu0
      %v851 = vadd.f32 %v780, %v850
      %v852 = vpop.f32.mrb[0].mxu0
      %853 = vmatprep.mubr.f32.mxu0 0.0
      %854 = vmatmul.mubr.f32.gmra.mrb[0].mxu0 %v345
      %v855 = vpop.f32.mrb[0].mxu0
      %v856 = vadd.f32 %v780, %v855
      %v857 = vpop.f32.mrb[0].mxu0
      %858 = vmatprep.mubr.f32.mxu0 0.0
      %859 = vmatmul.mubr.f32.gmra.mrb[0].mxu0 %v348
      %v860 = vpop.f32.mrb[0].mxu0
      %v861 = vadd.f32 %v780, %v860
      %v862 = vpop.f32.mrb[0].mxu0
      %863 = vmatprep.mubr.f32.mxu0 0.0
      %864 = vmatmul.mubr.f32.gmra.mrb[0].mxu0 %v351
      %v865 = vpop.f32.mrb[0].mxu0
      %v866 = vadd.f32 %v780, %v865
      %v867 = vpop.f32.mrb[0].mxu0
      %868 = vmatprep.mubr.f32.mxu0 0.0
      %869 = vmatmul.mubr.f32.gmra.mrb[0].mxu0 %v354
      %v870 = vpop.f32.mrb[0].mxu0
      %v871 = vadd.f32 %v780, %v870
      %v872 = vpop.f32.mrb[0].mxu0
      %873 = vmatprep.mubr.f32.mxu0 0.0
      %874 = vmatmul.mubr.f32.gmra.mrb[0].mxu0 %v357
      %v875 = vpop.f32.mrb[0].mxu0
      %v876 = vadd.f32 %v780, %v875
      %v877 = vpop.f32.mrb[0].mxu0
      %878 = vmatprep.mubr.f32.mxu0 0.0
      %879 = vmatmul.mubr.f32.gmra.mrb[0].mxu0 %v360
      %v880 = vpop.f32.mrb[0].mxu0
      %v881 = vadd.f32 %v780, %v880
      %v882 = vpop.f32.mrb[0].mxu0
      %883 = vmatprep.mubr.f32.mxu0 0.0
      %884 = vmatmul.mubr.f32.gmra.mrb[0].mxu0 %v363
      %v885 = vpop.f32.mrb[0].mxu0
      %v886 = vadd.f32 %v780, %v885
      %v887 = vpop.f32.mrb[0].mxu0
      %888 = vmatprep.mubr.f32.mxu0 0.0
      %889 = vmatmul.mubr.f32.gmra.mrb[0].mxu0 %v366
      %v890 = vpop.f32.mrb[0].mxu0
      %v891 = vadd.f32 %v780, %v890
      %v892 = vpop.f32.mrb[0].mxu0
      %893 = vmatprep.mubr.f32.mxu0 0.0
      %894 = vmatmul.mubr.f32.gmra.mrb[0].mxu0 %v369
      %v895 = vpop.f32.mrb[0].mxu0
      %v896 = vadd.f32 %v780, %v895
      %v897 = vpop.f32.mrb[0].mxu0
      %898 = vmatprep.mubr.f32.mxu0 0.0
      %899 = vmatmul.mubr.f32.gmra.mrb[0].mxu0 %v372
      %v900 = vpop.f32.mrb[0].mxu0
      %v901 = vadd.f32 %v780, %v900
      %v902 = vpop.f32.mrb[0].mxu0
      %903 = vmatprep.mubr.f32.mxu0 0.0
      %904 = vmatmul.mubr.f32.gmra.mrb[0].mxu0 %v375
      %v905 = vpop.f32.mrb[0].mxu0
      %v906 = vadd.f32 %v780, %v905
      %v907 = vpop.f32.mrb[0].mxu0
      %908 = vmatprep.mubr.f32.mxu0 0.0
      %909 = vmatmul.mubr.f32.gmra.mrb[0].mxu0 %v378
      %v910 = vpop.f32.mrb[0].mxu0
      %v911 = vadd.f32 %v780, %v910
      %v912 = vpop.f32.mrb[0].mxu0
      %913 = vmatprep.mubr.f32.mxu0 0.0
      %914 = vmatmul.mubr.f32.gmra.mrb[0].mxu0 %v381
      %v915 = vpop.f32.mrb[0].mxu0
      %v916 = vadd.f32 %v780, %v915
      %v917 = vpop.f32.mrb[0].mxu0
      %918 = vmatprep.mubr.f32.mxu0 0.0
      %919 = vmatmul.mubr.f32.gmra.mrb[0].mxu0 %v384
      %v920 = vpop.f32.mrb[0].mxu0
      %v921 = vadd.f32 %v780, %v920
      %v922 = vpop.f32.mrb[0].mxu0
      %923 = vmatprep.mubr.f32.mxu0 0.0
      %924 = vmatmul.mubr.f32.gmra.mrb[0].mxu0 %v387
      %v925 = vpop.f32.mrb[0].mxu0
      %v926 = vadd.f32 %v780, %v925
      %v927 = vpop.f32.mrb[0].mxu0
      %928 = vmatprep.mubr.f32.mxu0 0.0
      %929 = vmatmul.mubr.f32.gmra.mrb[0].mxu0 %v390
      %v930 = vpop.f32.mrb[0].mxu0
      %v931 = vadd.f32 %v780, %v930
      %v932 = vpop.f32.mrb[0].mxu0
      %933 = vmatprep.mubr.f32.mxu0 0.0
      %934 = vmatmul.mubr.f32.gmra.mrb[0].mxu0 %v393
      %v935 = vpop.f32.mrb[0].mxu0
      %v936 = vadd.f32 %v780, %v935
      %v937 = vpop.f32.mrb[0].mxu0
      %938 = vmatprep.mubr.f32.mxu0 0.0
      %939 = vmatmul.mubr.f32.gmra.mrb[0].mxu0 %v396
      %v940 = vpop.f32.mrb[0].mxu0
      %v941 = vadd.f32 %v780, %v940
      %v942 = vpop.f32.mrb[0].mxu0
      %943 = vmatprep.mubr.f32.mxu0 0.0
      %944 = vmatmul.mubr.f32.gmra.mrb[0].mxu0 %v399
      %v945 = vpop.f32.mrb[0].mxu0
      %v946 = vadd.f32 %v780, %v945
      %v947 = vpop.f32.mrb[0].mxu0
      %948 = vmatprep.mubr.f32.mxu0 0.0
      %949 = vmatmul.mubr.f32.gmra.mrb[0].mxu0 %v402
      %v950 = vpop.f32.mrb[0].mxu0
      %v951 = vadd.f32 %v780, %v950
      %v952 = vpop.f32.mrb[0].mxu0
      %953 = vmatprep.mubr.f32.mxu0 0.0
      %954 = vmatmul.mubr.f32.gmra.mrb[0].mxu0 %v405
      %v955 = vpop.f32.mrb[0].mxu0
      %v956 = vadd.f32 %v780, %v955
      %v957 = vpop.f32.mrb[0].mxu0
      %958 = vmatprep.mubr.f32.mxu0 0.0
      %959 = vmatmul.mubr.f32.gmra.mrb[0].mxu0 %v408
      %v960 = vpop.f32.mrb[0].mxu0
      %v961 = vadd.f32 %v780, %v960
      %v962 = vpop.f32.mrb[0].mxu0
      %963 = vmatprep.mubr.f32.mxu0 0.0
      %964 = vmatmul.mubr.f32.gmra.mrb[0].mxu0 %v411
      %v965 = vpop.f32.mrb[0].mxu0
      %v966 = vadd.f32 %v780, %v965
      %v967 = vpop.f32.mrb[0].mxu0
      %968 = vmatprep.mubr.f32.mxu0 0.0
      %969 = vmatmul.mubr.f32.gmra.mrb[0].mxu0 %v414
      %v970 = vpop.f32.mrb[0].mxu0
      %v971 = vadd.f32 %v780, %v970
      %v972 = vpop.f32.mrb[0].mxu0
      %973 = vmatprep.mubr.f32.mxu0 0.0
      %974 = vmatmul.mubr.f32.gmra.mrb[0].mxu0 %v417
      %v975 = vpop.f32.mrb[0].mxu0
      %v976 = vadd.f32 %v780, %v975
      %v977 = vpop.f32.mrb[0].mxu0
      %978 = vmatprep.mubr.f32.mxu0 0.0
      %979 = vmatmul.mubr.f32.gmra.mrb[0].mxu0 %v420
      %v980 = vpop.f32.mrb[0].mxu0
      %v981 = vadd.f32 %v780, %v980
      %v982 = vpop.f32.mrb[0].mxu0
      %983 = vmatprep.mubr.f32.mxu0 0.0
      %984 = vmatmul.mubr.f32.gmra.mrb[0].mxu0 %v423
      %v985 = vpop.f32.mrb[0].mxu0
      %v986 = vadd.f32 %v780, %v985
      %v987 = vpop.f32.mrb[0].mxu0
      %988 = vmatprep.mubr.f32.mxu0 0.0
      %989 = vmatmul.mubr.f32.gmra.mrb[0].mxu0 %v426
      %v990 = vpop.f32.mrb[0].mxu0
      %v991 = vadd.f32 %v780, %v990
      %v992 = vpop.f32.mrb[0].mxu0
      %993 = vmatprep.mubr.f32.mxu0 0.0
      %994 = vmatmul.mubr.f32.gmra.mrb[0].mxu0 %v429
      %v995 = vpop.f32.mrb[0].mxu0
      %v996 = vadd.f32 %v780, %v995
      %v997 = vpop.f32.mrb[0].mxu0
      %998 = vmatprep.mubr.f32.mxu0 0.0
      %999 = vmatmul.mubr.f32.gmra.mrb[0].mxu0 %v432
      %v1000 = vpop.f32.mrb[0].mxu0
      %v1001 = vadd.f32 %v780, %v1000
      %v1002 = vpop.f32.mrb[0].mxu0
      %1003 = vmatprep.mubr.f32.mxu0 0.0
      %1004 = vmatmul.mubr.f32.gmra.mrb[0].mxu0 %v435
      %v1005 = vpop.f32.mrb[0].mxu0
      %v1006 = vadd.f32 %v780, %v1005
      %v1007 = vpop.f32.mrb[0].mxu0
      %1008 = vdwg.mxu0
      %v1009 = vld [vmem:[%s5] sm:$0x1]
      %v1011 = vlaneseq
      %v1012 = vshrl.u32 %v1011, 7
      %v1013 = vsub.s32 0, %v1012
      %v1014 = vrot.slane %v1009, %v1013
      %v1016 = vadd.f32 %v851, %v1014
      %v1017 = vadd.f32 %v856, %v1014
      %v1018 = vadd.f32 %v861, %v1014
      %v1019 = vadd.f32 %v866, %v1014
      %v1020 = vadd.f32 %v871, %v1014
      %v1021 = vadd.f32 %v876, %v1014
      %v1022 = vadd.f32 %v881, %v1014
      %v1023 = vadd.f32 %v886, %v1014
      %v1024 = vadd.f32 %v891, %v1014
      %v1025 = vadd.f32 %v896, %v1014
      %v1026 = vadd.f32 %v901, %v1014
      %v1027 = vadd.f32 %v906, %v1014
      %v1028 = vadd.f32 %v911, %v1014
      %v1029 = vadd.f32 %v916, %v1014
      %v1030 = vadd.f32 %v921, %v1014
      %v1031 = vadd.f32 %v926, %v1014
      %v1032 = vadd.f32 %v931, %v1014
      %v1033 = vadd.f32 %v936, %v1014
      %v1034 = vadd.f32 %v941, %v1014
      %v1035 = vadd.f32 %v946, %v1014
      %v1036 = vadd.f32 %v951, %v1014
      %v1037 = vadd.f32 %v956, %v1014
      %v1038 = vadd.f32 %v961, %v1014
      %v1039 = vadd.f32 %v966, %v1014
      %v1040 = vadd.f32 %v971, %v1014
      %v1041 = vadd.f32 %v976, %v1014
      %v1042 = vadd.f32 %v981, %v1014
      %v1043 = vadd.f32 %v986, %v1014
      %v1044 = vadd.f32 %v991, %v1014
      %v1045 = vadd.f32 %v996, %v1014
      %v1046 = vadd.f32 %v1001, %v1014
      %v1047 = vadd.f32 %v1006, %v1014
      %1048 = vst.msk [vmem:[%s305] sm:$0xff] %vm666, %v1016
      %1049 = vst.msk [vmem:[%s305 + $0x8] sm:$0xff] %vm666, %v1017
      %1050 = vst.msk [vmem:[%s305 + $0x10] sm:$0xff] %vm666, %v1018
      %1051 = vst.msk [vmem:[%s305 + $0x18] sm:$0xff] %vm666, %v1019
      %1052 = vst.msk [vmem:[%s305 + $0x20] sm:$0xff] %vm666, %v1020
      %1053 = vst.msk [vmem:[%s305 + $0x28] sm:$0xff] %vm666, %v1021
      %1054 = vst.msk [vmem:[%s305 + $0x30] sm:$0xff] %vm666, %v1022
      %1055 = vst.msk [vmem:[%s305 + $0x38] sm:$0xff] %vm666, %v1023
      %1056 = vst.msk [vmem:[%s305 + $0x40] sm:$0xff] %vm666, %v1024
      %1057 = vst.msk [vmem:[%s305 + $0x48] sm:$0xff] %vm666, %v1025
      %1058 = vst.msk [vmem:[%s305 + $0x50] sm:$0xff] %vm666, %v1026
      %1059 = vst.msk [vmem:[%s305 + $0x58] sm:$0xff] %vm666, %v1027
      %1060 = vst.msk [vmem:[%s305 + $0x60] sm:$0xff] %vm666, %v1028
      %1061 = vst.msk [vmem:[%s305 + $0x68] sm:$0xff] %vm666, %v1029
      %1062 = vst.msk [vmem:[%s305 + $0x70] sm:$0xff] %vm666, %v1030
      %1063 = vst.msk [vmem:[%s305 + $0x78] sm:$0xff] %vm666, %v1031
      %1064 = vst.msk [vmem:[%s305 + $0x80] sm:$0xff] %vm666, %v1032
      %1065 = vst.msk [vmem:[%s305 + $0x88] sm:$0xff] %vm666, %v1033
      %1066 = vst.msk [vmem:[%s305 + $0x90] sm:$0xff] %vm666, %v1034
      %1067 = vst.msk [vmem:[%s305 + $0x98] sm:$0xff] %vm666, %v1035
      %1068 = vst.msk [vmem:[%s305 + $0xa0] sm:$0xff] %vm666, %v1036
      %1069 = vst.msk [vmem:[%s305 + $0xa8] sm:$0xff] %vm666, %v1037
      %1070 = vst.msk [vmem:[%s305 + $0xb0] sm:$0xff] %vm666, %v1038
      %1071 = vst.msk [vmem:[%s305 + $0xb8] sm:$0xff] %vm666, %v1039
      %1072 = vst.msk [vmem:[%s305 + $0xc0] sm:$0xff] %vm666, %v1040
      %1073 = vst.msk [vmem:[%s305 + $0xc8] sm:$0xff] %vm666, %v1041
      %1074 = vst.msk [vmem:[%s305 + $0xd0] sm:$0xff] %vm666, %v1042
      %1075 = vst.msk [vmem:[%s305 + $0xd8] sm:$0xff] %vm666, %v1043
      %1076 = vst.msk [vmem:[%s305 + $0xe0] sm:$0xff] %vm666, %v1044
      %1077 = vst.msk [vmem:[%s305 + $0xe8] sm:$0xff] %vm666, %v1045
      %1078 = vst.msk [vmem:[%s305 + $0xf0] sm:$0xff] %vm666, %v1046
      %1079 = vst.msk [vmem:[%s305 + $0xf8] sm:$0xff] %vm666, %v1047
      %p1080 = scmp.lt.s32.totalorder %s19, 1
      %s1081 = scalar_select %p1080, %s19, 1
      %s1082 = smul.addr %s1081, 32
      %s1083 = smul.addr %s1082, 8
      %s1084 = scalar_lea.vmem %s6, %s1083
      %p1085 = scmp.lt.s32.totalorder %s19, 1
      %s1086 = scalar_select %p1085, %s19, 1
      %s1087 = smul.addr %s1086, 32
      %s1088 = smul.addr %s1087, 8
      %s1089 = scalar_lea.vmem %s7, %s1088
      // Predicated region
      $region45: #{tpu_custom_call.1} parent=43 // pred_check
        %p1090 = pneg %p173
      $region46: #{tpu_custom_call.1} parent=43 // pred_check_branch
        %1092 = sbr.rel (%p1090) target = $region48
      $region47: #{tpu_custom_call.1} parent=43 // pred_region
        _
      $region48: #{tpu_custom_call.1} parent=43 // pred_fallthru
        _
      // Predicated region
      $region49: #{tpu_custom_call.1} parent=43 // pred_check
        %p1093 = pneg %p199
      $region50: #{tpu_custom_call.1} parent=43 // pred_check_branch
        %1095 = sbr.rel (%p1093) target = $region52
      $region51: #{tpu_custom_call.1} parent=43 // pred_region
        _
      $region52: #{tpu_custom_call.1} parent=43 // pred_fallthru
        _
    $region44: #{tpu_custom_call.1} parent=5 // pred_fallthru
      _
    %p1096 = scmp.le.s32.totalorder 2, %s14
    // Predicated region
    $region53: #{tpu_custom_call.1} parent=5 // pred_check
      %p1097 = pneg %p1096
    $region54: #{tpu_custom_call.1} parent=5 // pred_check_branch
      %1099 = sbr.rel (%p1097) target = $region56
    $region55: #{tpu_custom_call.1} parent=5 // pred_region
      %s1100 = ssub.s32 %s14, 2
      // Predicated region
      $region57: #{tpu_custom_call.1} parent=55 // pred_check
        %p1101 = pneg %p179
      $region58: #{tpu_custom_call.1} parent=55 // pred_check_branch
        %1103 = sbr.rel (%p1101) target = $region60
      $region59: #{tpu_custom_call.1} parent=55 // pred_region
        %p1104 = scmp.lt.s32.totalorder %s20, 1
        %s1105 = scalar_select %p1104, %s20, 1
        %s1106 = smul.addr %s1105, 32
        %s1107 = smul.addr %s1106, 8
        %s1108 = scalar_lea.vmem %s6, %s1107
      $region60: #{tpu_custom_call.1} parent=55 // pred_fallthru
        _
      // Predicated region
      $region61: #{tpu_custom_call.1} parent=55 // pred_check
        %p1109 = pneg %p205
      $region62: #{tpu_custom_call.1} parent=55 // pred_check_branch
        %1111 = sbr.rel (%p1109) target = $region64
      $region63: #{tpu_custom_call.1} parent=55 // pred_region
        %p1112 = scmp.lt.s32.totalorder %s20, 1
        %s1113 = scalar_select %p1112, %s20, 1
        %s1114 = smul.addr %s1113, 32
        %s1115 = smul.addr %s1114, 8
        %s1116 = scalar_lea.vmem %s7, %s1115
      $region64: #{tpu_custom_call.1} parent=55 // pred_fallthru
        _
    $region56: #{tpu_custom_call.1} parent=5 // pred_fallthru
      _
  $region6: #{tpu_custom_call.1} parent=0 // loop_footer
    %s18 = sadd.s32 1, %s14
  $region7: #{tpu_custom_call.1} parent=0 // loop_footer_branch
    %13 = sbr.rel target = $region3
  $region8: #{tpu_custom_call.1} parent=0 // loop_exit
    _

</llo_original>
